<compile_context>
chip_gen: v7x
topology: tpu7x:2x2x1
jax: 0.10.0
libtpu: 0.0.40
codegen_flags: <defaults>
</compile_context>

<pallas_src>
import jax
import jax.numpy as jnp
from jax.experimental import pallas as pl
from jax.experimental.pallas import tpu as pltpu


def _batch_a_nconv_kernel(x_ref, a_ref, o_ref):
    # x_ref: (BN, TC, V, L)   a_ref: (BN, W, V)   o_ref: (BN, TC, W, L)
    bn, tc = x_ref.shape[0], x_ref.shape[1]
    for b in range(bn):                       # static unroll
        a = a_ref[b]                          # (W, V), reused across the C tile
        for c in range(tc):                   # static unroll
            o_ref[b, c] = jnp.dot(
                a, x_ref[b, c], preferred_element_type=jnp.float32
            ).astype(o_ref.dtype)


def _round_up(x, m):
    return -(-x // m) * m


def _pick_tiles(N, C, V, L, W, itemsize):
    """Choose (BN, TC) block sizes for the (N, C) grid axes."""
    budget = 8 * 1024 * 1024   # double-buffered block budget; safe on v5e/v6e/v7x
    max_unroll = 32            # cap on statically unrolled matmuls per grid step

    def slab(minor2, minor1):
        # VMEM bytes of one (minor2, minor1) slab after (8, 128) tiling/padding.
        return _round_up(minor2, 8) * _round_up(minor1, 128) * itemsize

    def footprint(bn, tc):
        x_b = bn * tc * slab(V, L)
        o_b = bn * tc * slab(W, L)
        a_b = bn * slab(W, V)
        return 2 * (x_b + o_b + a_b)          # x2 for double buffering

    # Largest divisor of C whose blocks fit the budget (keeps HBM runs contiguous).
    tc = 1
    for d in range(C, 0, -1):
        if C % d == 0 and d <= max_unroll and footprint(1, d) <= budget:
            tc = d
            break

    # Grow BN to amortize per-step overhead, keeping >= 2 grid steps when possible.
    bn = 1
    steps_bn1 = N * (C // tc)
    for d in range(N, 0, -1):
        steps = (N // d) * (C // tc)
        if (N % d == 0 and d * tc <= max_unroll
                and footprint(d, tc) <= budget
                and (steps >= 2 or steps_bn1 < 2)):
            bn = d
            break
    return bn, tc


def batch_a_nconv(x, A):
    """x: (N, C, V, L), A: (N, W, V) -> (N, C, W, L) == torch.einsum('ncvl,nwv->ncwl')."""
    N, C, V, L = x.shape
    Na, W, Va = A.shape
    assert Na == N and Va == V, "A must be (N, W, V) with matching N and V"

    out_dtype = jnp.promote_types(x.dtype, A.dtype)
    x = x.astype(out_dtype)
    A = A.astype(out_dtype)

    BN, TC = _pick_tiles(N, C, V, L, W, jnp.dtype(out_dtype).itemsize)

    return pl.pallas_call(
        _batch_a_nconv_kernel,
        out_shape=jax.ShapeDtypeStruct((N, C, W, L), out_dtype),
        grid=(N // BN, C // TC),
        in_specs=[
            # x in native layout: each block is a contiguous (BN*TC*V*L) HBM run.
            pl.BlockSpec((BN, TC, V, L), lambda n, c: (n, c, 0, 0)),
            # A ignores the C-tile axis -> stays resident in VMEM across C tiles.
            pl.BlockSpec((BN, W, V), lambda n, c: (n, 0, 0)),
        ],
        # Output written directly in native (N, C, W, L): no wrapper transpose.
        out_specs=pl.BlockSpec((BN, TC, W, L), lambda n, c: (n, c, 0, 0)),
        compiler_params=pltpu.CompilerParams(
            # Both axes are independent -> shard across v7x's 2 TensorCores.
            dimension_semantics=("parallel", "parallel"),
            # Explicit scoped-VMEM limit: within v7x's 64 MiB physical, raises
            # v5e's 16 MiB default; the ~8 MiB block budget stays well under it.
            vmem_limit_bytes=32 * 1024 * 1024,
        ),
    )(x, A)


if __name__ == "__main__":
    key = jax.random.PRNGKey(0)
    kx, ka = jax.random.split(key)

    N, C, V, L = 2, 4, 16, 16   # batch, channels, num nodes (v), seq len
    W = 16                      # output node dim of adjacency A

    x = jax.random.normal(kx, (N, C, V, L), dtype=jnp.float32)
    A = jax.random.normal(ka, (N, W, V), dtype=jnp.float32)

    out = jax.block_until_ready(batch_a_nconv(x, A))

    # reference check against plain-JAX einsum (same semantics as torch.einsum)
    ref = jnp.einsum("ncvl,nwv->ncwl", x, A)
    assert out.shape == (N, C, W, L)
    assert jnp.allclose(out, ref, atol=1e-5, rtol=1e-5)

    print("KERNEL_OK")
</pallas_src>

<mosaic_0001>
module attributes {stable_mosaic.version = 11 : i64} {
  func.func @_batch_a_nconv_kernel(%arg0: i32, %arg1: i32, %arg2: memref<1x4x16x16xf32, #tpu.memory_space<vmem>>, %arg3: memref<1x16x16xf32, #tpu.memory_space<vmem>>, %arg4: memref<1x4x16x16xf32, #tpu.memory_space<vmem>>) attributes {dimension_semantics = [#tpu.dimension_semantics<parallel>, #tpu.dimension_semantics<parallel>], iteration_bounds = array<i64: 2, 1>, scalar_prefetch = 0 : i64, scratch_operands = 0 : i64, tpu.core_type = #tpu.core_type<tc>, window_params = [{transform_indices = @transform_0, window_bounds = array<i64: 1, 4, 16, 16>}, {transform_indices = @transform_1, window_bounds = array<i64: 1, 16, 16>}, {transform_indices = @transform_2, window_bounds = array<i64: 1, 4, 16, 16>}]} {
    %c0 = arith.constant 0 : index
    %c0_0 = arith.constant 0 : index
    %c0_1 = arith.constant 0 : index
    %0 = vector.load %arg3[%c0, %c0_0, %c0_1] : memref<1x16x16xf32, #tpu.memory_space<vmem>>, vector<1x16x16xf32>
    %1 = vector.shape_cast %0 : vector<1x16x16xf32> to vector<16x16xf32>
    %c0_2 = arith.constant 0 : index
    %c0_3 = arith.constant 0 : index
    %c0_4 = arith.constant 0 : index
    %c0_5 = arith.constant 0 : index
    %2 = vector.load %arg2[%c0_2, %c0_3, %c0_4, %c0_5] : memref<1x4x16x16xf32, #tpu.memory_space<vmem>>, vector<1x1x16x16xf32>
    %3 = vector.shape_cast %2 : vector<1x1x16x16xf32> to vector<16x16xf32>
    %cst = arith.constant dense<0.000000e+00> : vector<16x16xf32>
    %4 = tpu.matmul %1, %3, %cst {dimension_numbers = #tpu.dot_dimension_numbers<[1], [0], [0], [1], [0, 0, 1, 1], [], []>} : vector<16x16xf32>, vector<16x16xf32>, vector<16x16xf32> -> vector<16x16xf32>
    %c0_6 = arith.constant 0 : index
    %c0_7 = arith.constant 0 : index
    %c0_8 = arith.constant 0 : index
    %c0_9 = arith.constant 0 : index
    %5 = vector.load %arg4[%c0_6, %c0_7, %c0_8, %c0_9] : memref<1x4x16x16xf32, #tpu.memory_space<vmem>>, vector<1x1x16x16xf32>
    %6 = vector.shape_cast %5 : vector<1x1x16x16xf32> to vector<16x16xf32>
    %7 = vector.shape_cast %4 : vector<16x16xf32> to vector<1x1x16x16xf32>
    tpu.vector_store %arg4[%c0_6, %c0_7, %c0_8, %c0_9], %7 {strides = array<i32>} : memref<1x4x16x16xf32, #tpu.memory_space<vmem>>, vector<1x1x16x16xf32>,
    %c0_10 = arith.constant 0 : index
    %c1 = arith.constant 1 : index
    %c0_11 = arith.constant 0 : index
    %c0_12 = arith.constant 0 : index
    %8 = vector.load %arg2[%c0_10, %c1, %c0_11, %c0_12] : memref<1x4x16x16xf32, #tpu.memory_space<vmem>>, vector<1x1x16x16xf32>
    %9 = vector.shape_cast %8 : vector<1x1x16x16xf32> to vector<16x16xf32>
    %cst_13 = arith.constant dense<0.000000e+00> : vector<16x16xf32>
    %10 = tpu.matmul %1, %9, %cst_13 {dimension_numbers = #tpu.dot_dimension_numbers<[1], [0], [0], [1], [0, 0, 1, 1], [], []>} : vector<16x16xf32>, vector<16x16xf32>, vector<16x16xf32> -> vector<16x16xf32>
    %c0_14 = arith.constant 0 : index
    %c1_15 = arith.constant 1 : index
    %c0_16 = arith.constant 0 : index
    %c0_17 = arith.constant 0 : index
    %11 = vector.load %arg4[%c0_14, %c1_15, %c0_16, %c0_17] : memref<1x4x16x16xf32, #tpu.memory_space<vmem>>, vector<1x1x16x16xf32>
    %12 = vector.shape_cast %11 : vector<1x1x16x16xf32> to vector<16x16xf32>
    %13 = vector.shape_cast %10 : vector<16x16xf32> to vector<1x1x16x16xf32>
    tpu.vector_store %arg4[%c0_14, %c1_15, %c0_16, %c0_17], %13 {strides = array<i32>} : memref<1x4x16x16xf32, #tpu.memory_space<vmem>>, vector<1x1x16x16xf32>,
    %c0_18 = arith.constant 0 : index
    %c2 = arith.constant 2 : index
    %c0_19 = arith.constant 0 : index
    %c0_20 = arith.constant 0 : index
    %14 = vector.load %arg2[%c0_18, %c2, %c0_19, %c0_20] : memref<1x4x16x16xf32, #tpu.memory_space<vmem>>, vector<1x1x16x16xf32>
    %15 = vector.shape_cast %14 : vector<1x1x16x16xf32> to vector<16x16xf32>
    %cst_21 = arith.constant dense<0.000000e+00> : vector<16x16xf32>
    %16 = tpu.matmul %1, %15, %cst_21 {dimension_numbers = #tpu.dot_dimension_numbers<[1], [0], [0], [1], [0, 0, 1, 1], [], []>} : vector<16x16xf32>, vector<16x16xf32>, vector<16x16xf32> -> vector<16x16xf32>
    %c0_22 = arith.constant 0 : index
    %c2_23 = arith.constant 2 : index
    %c0_24 = arith.constant 0 : index
    %c0_25 = arith.constant 0 : index
    %17 = vector.load %arg4[%c0_22, %c2_23, %c0_24, %c0_25] : memref<1x4x16x16xf32, #tpu.memory_space<vmem>>, vector<1x1x16x16xf32>
    %18 = vector.shape_cast %17 : vector<1x1x16x16xf32> to vector<16x16xf32>
    %19 = vector.shape_cast %16 : vector<16x16xf32> to vector<1x1x16x16xf32>
    tpu.vector_store %arg4[%c0_22, %c2_23, %c0_24, %c0_25], %19 {strides = array<i32>} : memref<1x4x16x16xf32, #tpu.memory_space<vmem>>, vector<1x1x16x16xf32>,
    %c0_26 = arith.constant 0 : index
    %c3 = arith.constant 3 : index
    %c0_27 = arith.constant 0 : index
    %c0_28 = arith.constant 0 : index
    %20 = vector.load %arg2[%c0_26, %c3, %c0_27, %c0_28] : memref<1x4x16x16xf32, #tpu.memory_space<vmem>>, vector<1x1x16x16xf32>
    %21 = vector.shape_cast %20 : vector<1x1x16x16xf32> to vector<16x16xf32>
    %cst_29 = arith.constant dense<0.000000e+00> : vector<16x16xf32>
    %22 = tpu.matmul %1, %21, %cst_29 {dimension_numbers = #tpu.dot_dimension_numbers<[1], [0], [0], [1], [0, 0, 1, 1], [], []>} : vector<16x16xf32>, vector<16x16xf32>, vector<16x16xf32> -> vector<16x16xf32>
    %c0_30 = arith.constant 0 : index
    %c3_31 = arith.constant 3 : index
    %c0_32 = arith.constant 0 : index
    %c0_33 = arith.constant 0 : index
    %23 = vector.load %arg4[%c0_30, %c3_31, %c0_32, %c0_33] : memref<1x4x16x16xf32, #tpu.memory_space<vmem>>, vector<1x1x16x16xf32>
    %24 = vector.shape_cast %23 : vector<1x1x16x16xf32> to vector<16x16xf32>
    %25 = vector.shape_cast %22 : vector<16x16xf32> to vector<1x1x16x16xf32>
    tpu.vector_store %arg4[%c0_30, %c3_31, %c0_32, %c0_33], %25 {strides = array<i32>} : memref<1x4x16x16xf32, #tpu.memory_space<vmem>>, vector<1x1x16x16xf32>,
    return
  }
  func.func @transform_0(%arg0: i32, %arg1: i32) -> (i32, i32, i32, i32) {
    %c0_i32 = arith.constant 0 : i32
    %c0_i32_0 = arith.constant 0 : i32
    %c0_i32_1 = arith.constant 0 : i32
    return %arg0, %arg1, %c0_i32, %c0_i32_0 : i32, i32, i32, i32
  }
  func.func @transform_1(%arg0: i32, %arg1: i32) -> (i32, i32, i32) {
    %c0_i32 = arith.constant 0 : i32
    %c0_i32_0 = arith.constant 0 : i32
    %c0_i32_1 = arith.constant 0 : i32
    return %arg0, %c0_i32, %c0_i32_0 : i32, i32, i32
  }
  func.func @transform_2(%arg0: i32, %arg1: i32) -> (i32, i32, i32, i32) {
    %c0_i32 = arith.constant 0 : i32
    %c0_i32_0 = arith.constant 0 : i32
    %c0_i32_1 = arith.constant 0 : i32
    return %arg0, %arg1, %c0_i32, %c0_i32_0 : i32, i32, i32, i32
  }
}

</mosaic_0001>

<llo_original>
// kernel: tpu_custom_call.1
$region0: #{tpu_custom_call.1}
  #allocation0 [shape = 'u32[]', space=smem, size = 0x4, offset = 0x4, fixed_abs, tag = 'smem constant byte address 0x4 - core index']
  #allocation1 [shape = 'u32[144,128]{1,0:T(1,128)}', space=vmem, size = 0x12000, scoped, tag = 'internal scratch']
  %s0 = inlined_call_operand.hbm [shape: f32[2,4,16,16], index: 0, kind: input, shape index: {}]
  %s1 = inlined_call_operand.hbm [shape: f32[2,16,16], index: 1, kind: input, shape index: {}]
  %s2 = inlined_call_operand.hbm [shape: f32[2,4,16,16], index: 2, kind: output, shape index: {}]
  %s3 = sld [smem:[#allocation0]]
  $region49: #{tpu_custom_call.1} parent=0
    _
  %s5 = ssub.s32 1, %s3
  %s6 = scalar_select 0, %s5, %s3
  $region1: #{tpu_custom_call.1} parent=0
    #allocation2 [shape = 'u8[65536]{0}', space=vmem, size = 0x10000, scoped, tag = 'input window, operand 0']
    #allocation3 [shape = 's32[2]{0}', space=sflag, size = 0x8, scoped, tag = 'scoped memory for tpu_custom_call.1']
    #allocation4 [shape = 's32[2]{0}', space=sflag, size = 0x8, scoped, tag = 'scoped memory for tpu_custom_call.1']
    #allocation5 [shape = 'u8[16384]{0}', space=vmem, size = 0x4000, scoped, tag = 'input window, operand 1']
    #allocation6 [shape = 's32[2]{0}', space=sflag, size = 0x8, scoped, tag = 'scoped memory for tpu_custom_call.1']
    #allocation7 [shape = 'u8[65536]{0}', space=vmem, size = 0x10000, scoped, tag = 'output window, operand 0']
    %7 = vsyncpa [#allocation3], 0
    %s8 = scalar_lea.sflag [#allocation3], 1
    %9 = vsyncpa %s8, 0
    %10 = vsyncpa [#allocation6], 0
    %s11 = scalar_lea.sflag [#allocation6], 1
    %12 = vsyncpa %s11, 0
    %13 = vsyncpa [#allocation4], 0
    %s14 = scalar_lea.sflag [#allocation4], 1
    %15 = vsyncpa %s14, 0
    loop: start=0, step=1, limit=4
    $region2: #{tpu_custom_call.1} parent=1 // loop_pre_header
      _
    $region3: #{tpu_custom_call.1} parent=1 // loop_header
      %s17 = sphi 0, %s21
      %p18 = scmp.ge.s32.totalorder %s17, 4
      %s24 = sphi 0, %s36
      %s25 = sphi 0, %s32
      %s26 = sphi 0, %s24
      %s27 = sphi 0, %s25
      %s28 = sphi 0, %s26
      %s29 = sphi 0, %s27
      %s41 = sphi 0, %s43
      %s44 = sphi 0, %s41
      %s45 = sphi 0, %s44
      %s61 = sphi 0, %s45
      %s67 = sphi 0, %s69
      %s70 = sphi 0, %s67
      %s71 = sphi 0, %s70
      %s87 = sphi 0, %s71
      %s95 = sphi 0, %s97
      %s98 = sphi 0, %s95
      %s99 = sphi 0, %s98
      %s115 = sphi 0, %s99
    $region4: #{tpu_custom_call.1} parent=1 // loop_header_branch
      %20 = sbr.rel (%p18) target = $region8
    $region5: #{tpu_custom_call.1} parent=1 // loop_body
      %s22 = ssub.s32 %s17, 1
      %s23 = ssub.s32 %s17, 2
      %s30 = sadd.s32 1, %s25
      %p31 = scmp.ge.s32.totalorder %s30, 1
      %s32 = scalar_select %p31, 0, %s30
      %s33 = sadd.s32 1, %s24
      %s34 = scalar_select %p31, %s33, %s24
      %p35 = scmp.ge.s32.totalorder %s34, 2
      %s36 = scalar_select %p35, 0, %s34
      %s37 = ssub.s32 %s24, %s36
      %s38 = ssub.s32 %s25, %s32
      %s39 = sor.u32 %s37, %s38
      %p40 = scmp.eq.s32.totalorder %s39, 0
      %s42 = sadd.s32 %s41, 1
      %s43 = scalar_select %p40, %s41, %s42
      %p46 = pneg %p40
      %p47 = scmp.eq.s32.totalorder %s17, 1
      %p48 = por %p46, %p47
      %p49 = scmp.ne.s32.totalorder %s41, %s44
      %p50 = scmp.eq.s32.totalorder %s17, 0
      %p51 = por %p49, %p50
      %p52 = scmp.ne.s32.totalorder %s41, %s44
      %p53 = scmp.eq.s32.totalorder %s22, 1
      %p54 = por %p52, %p53
      %p55 = scmp.ne.s32.totalorder %s44, %s45
      %p56 = scmp.eq.s32.totalorder %s22, 0
      %p57 = por %p55, %p56
      %p58 = scmp.ne.s32.totalorder %s44, %s45
      %p59 = scmp.eq.s32.totalorder %s23, 1
      %p60 = por %p58, %p59
      %p62 = scmp.ne.s32.totalorder %s45, %s61
      %p63 = scmp.eq.s32.totalorder %s23, 0
      %p64 = por %p62, %p63
      %s65 = ssub.s32 %s24, %s36
      %p66 = scmp.eq.s32.totalorder %s65, 0
      %s68 = sadd.s32 %s67, 1
      %s69 = scalar_select %p66, %s67, %s68
      %p72 = pneg %p66
      %p73 = scmp.eq.s32.totalorder %s17, 1
      %p74 = por %p72, %p73
      %p75 = scmp.ne.s32.totalorder %s67, %s70
      %p76 = scmp.eq.s32.totalorder %s17, 0
      %p77 = por %p75, %p76
      %p78 = scmp.ne.s32.totalorder %s67, %s70
      %p79 = scmp.eq.s32.totalorder %s22, 1
      %p80 = por %p78, %p79
      %p81 = scmp.ne.s32.totalorder %s70, %s71
      %p82 = scmp.eq.s32.totalorder %s22, 0
      %p83 = por %p81, %p82
      %p84 = scmp.ne.s32.totalorder %s70, %s71
      %p85 = scmp.eq.s32.totalorder %s23, 1
      %p86 = por %p84, %p85
      %p88 = scmp.ne.s32.totalorder %s71, %s87
      %p89 = scmp.eq.s32.totalorder %s23, 0
      %p90 = por %p88, %p89
      %s91 = ssub.s32 %s24, %s36
      %s92 = ssub.s32 %s25, %s32
      %s93 = sor.u32 %s91, %s92
      %p94 = scmp.eq.s32.totalorder %s93, 0
      %s96 = sadd.s32 %s95, 1
      %s97 = scalar_select %p94, %s95, %s96
      %p100 = pneg %p94
      %p101 = scmp.eq.s32.totalorder %s17, 1
      %p102 = por %p100, %p101
      %p103 = scmp.ne.s32.totalorder %s95, %s98
      %p104 = scmp.eq.s32.totalorder %s17, 0
      %p105 = por %p103, %p104
      %p106 = scmp.ne.s32.totalorder %s95, %s98
      %p107 = scmp.eq.s32.totalorder %s22, 1
      %p108 = por %p106, %p107
      %p109 = scmp.ne.s32.totalorder %s98, %s99
      %p110 = scmp.eq.s32.totalorder %s22, 0
      %p111 = por %p109, %p110
      %p112 = scmp.ne.s32.totalorder %s98, %s99
      %p113 = scmp.eq.s32.totalorder %s23, 1
      %p114 = por %p112, %p113
      %p116 = scmp.ne.s32.totalorder %s99, %s115
      %p117 = scmp.eq.s32.totalorder %s23, 0
      %p118 = por %p116, %p117
      %p119 = scmp.le.s32.totalorder 1, %s17
      %p120 = scmp.lt.s32.totalorder %s17, 3
      %p121 = pnand %p119, %p120
      %p122 = pneg %p121
      // Predicated region
      $region9: #{tpu_custom_call.1} parent=5 // pred_check
        _
      $region10: #{tpu_custom_call.1} parent=5 // pred_check_branch
        %124 = sbr.rel (%p121) target = $region12
      $region11: #{tpu_custom_call.1} parent=5 // pred_region
        %s125 = ssub.s32 %s17, 1
      $region12: #{tpu_custom_call.1} parent=5 // pred_fallthru
        _
      %p126 = scmp.lt.s32.totalorder %s17, 2
      // Predicated region
      $region13: #{tpu_custom_call.1} parent=5 // pred_check
        %p127 = pneg %p126
      $region14: #{tpu_custom_call.1} parent=5 // pred_check_branch
        %129 = sbr.rel (%p127) target = $region16
      $region15: #{tpu_custom_call.1} parent=5 // pred_region
        // Predicated region
        $region17: #{tpu_custom_call.1} parent=15 // pred_check
          %p130 = pneg %p51
        $region18: #{tpu_custom_call.1} parent=15 // pred_check_branch
          %132 = sbr.rel (%p130) target = $region20
        $region19: #{tpu_custom_call.1} parent=15 // pred_region
          %s133 = sand.u32 %s41, 1
          %s134 = scalar_lea.sflag [#allocation3], %s133
          %s135 = sand.u32 %s41, 1
          %s136 = smul.addr %s135, 64
          %s137 = scalar_lea.vmem [#allocation2], %s136
          %s138 = smul.u32 4, %s25
          %s140 = ssub.s32 1024, 1024
          %141 = vsyncadd %s134, %s140
          %s142 = smul.addr %s138, 2
          %s143 = smul.addr %s24, 8
          %s144 = sadd.s32 %s142, %s143
          %s145 = smul.addr %s144, 128
          %s146 = scalar_lea.hbm %s0, %s145
          %s147 = sshll.u32 %s137, 4
          %s148 = int_to_ptr.vmem [resolvable:$true] %s147
          %153 = dma.hbm_to_vmem [thread:$0]  %s146, 1024, %s148, %s134, 128, 128, 8
        $region20: #{tpu_custom_call.1} parent=15 // pred_fallthru
          _
        // Predicated region
        $region21: #{tpu_custom_call.1} parent=15 // pred_check
          %p154 = pneg %p77
        $region22: #{tpu_custom_call.1} parent=15 // pred_check_branch
          %156 = sbr.rel (%p154) target = $region24
        $region23: #{tpu_custom_call.1} parent=15 // pred_region
          %s157 = sand.u32 %s67, 1
          %s158 = scalar_lea.sflag [#allocation6], %s157
          %s159 = sand.u32 %s67, 1
          %s160 = smul.addr %s159, 16
          %s161 = scalar_lea.vmem [#allocation5], %s160
          %s163 = ssub.s32 256, 256
          %164 = vsyncadd %s158, %s163
          %s165 = smul.addr %s24, 2
          %s166 = smul.addr %s165, 128
          %s167 = scalar_lea.hbm %s1, %s166
          %s168 = sshll.u32 %s161, 4
          %s169 = int_to_ptr.vmem [resolvable:$true] %s168
          %174 = dma.hbm_to_vmem [thread:$0]  %s167, 256, %s169, %s158, 128, 128, 8
        $region24: #{tpu_custom_call.1} parent=15 // pred_fallthru
          _
      $region16: #{tpu_custom_call.1} parent=5 // pred_fallthru
        _
      %p175 = scmp.le.s32.totalorder 1, %s17
      %p176 = scmp.lt.s32.totalorder %s17, 3
      %p177 = pnand %p175, %p176
      %p178 = pneg %p177
      // Predicated region
      $region25: #{tpu_custom_call.1} parent=5 // pred_check
        _
      $region26: #{tpu_custom_call.1} parent=5 // pred_check_branch
        %180 = sbr.rel (%p177) target = $region28
      $region27: #{tpu_custom_call.1} parent=5 // pred_region
        %s181 = ssub.s32 %s17, 1
        %s182 = sand.u32 %s44, 1
        %s183 = scalar_lea.sflag [#allocation3], %s182
        %s184 = sand.u32 %s44, 1
        %s185 = smul.addr %s184, 64
        %s186 = scalar_lea.vmem [#allocation2], %s185
        // Predicated region
        $region29: #{tpu_custom_call.1} parent=27 // pred_check
          %p187 = pneg %p57
        $region30: #{tpu_custom_call.1} parent=27 // pred_check_branch
          %189 = sbr.rel (%p187) target = $region32
        $region31: #{tpu_custom_call.1} parent=27 // pred_region
          %190 = dma.done %s183, 1024
        $region32: #{tpu_custom_call.1} parent=27 // pred_fallthru
          _
        %s191 = sand.u32 %s70, 1
        %s192 = scalar_lea.sflag [#allocation6], %s191
        %s193 = sand.u32 %s70, 1
        %s194 = smul.addr %s193, 16
        %s195 = scalar_lea.vmem [#allocation5], %s194
        // Predicated region
        $region33: #{tpu_custom_call.1} parent=27 // pred_check
          %p196 = pneg %p83
        $region34: #{tpu_custom_call.1} parent=27 // pred_check_branch
          %198 = sbr.rel (%p196) target = $region36
        $region35: #{tpu_custom_call.1} parent=27 // pred_region
          %199 = dma.done %s192, 256
        $region36: #{tpu_custom_call.1} parent=27 // pred_fallthru
          _
        %s200 = sand.u32 %s44, 1
        %s201 = scalar_lea.sflag [#allocation3], %s200
        %s202 = sand.u32 %s44, 1
        %s203 = smul.addr %s202, 64
        %s204 = scalar_lea.vmem [#allocation2], %s203
        %p205 = pneg %p57
        %p206 = pneg %p54
        %s207 = sand.u32 %s70, 1
        %s208 = scalar_lea.sflag [#allocation6], %s207
        %s209 = sand.u32 %s70, 1
        %s210 = smul.addr %s209, 16
        %s211 = scalar_lea.vmem [#allocation5], %s210
        %p212 = pneg %p83
        %p213 = pneg %p80
        %p214 = pneg %p111
        %p215 = pneg %p108
        %s216 = sand.u32 %s98, 1
        %s217 = scalar_lea.sflag [#allocation4], %s216
        %s218 = sand.u32 %s98, 1
        %s219 = smul.addr %s218, 64
        %s220 = scalar_lea.vmem [#allocation7], %s219
        %s221 = smul.u32 4, %s27
        %s222 = smul.u32 4, %s27
        %v223 = vld [vmem:[%s195] sm:$0xff]
        %v224 = vld [vmem:[%s195 + $0x8] sm:$0xff]
        %v225 = vld [vmem:[%s186] sm:$0xff]
        %v226 = vld [vmem:[%s186 + $0x8] sm:$0xff]
        %vm227 = vcmask 130048
        %v229 = vsel %vm227, %v223, 0
        %v232 = vsel %vm227, %v224, 0
        %234 = vmatprep.subr.mxu0 0.0
        %235 = vmatpush1.msra.mxu0 %v225
        %236 = vmatprep.subr.mxu0 0.0
        %237 = vmatpush1.msra.mxu0 %v226
        %238 = vmatprep.subr.mxu0 0.0
        %239 = vmatpush1.msra.mxu0 0.0
        %240 = vmatprep.subr.mxu0 0.0
        %241 = vmatpush1.msra.mxu0 0.0
        %242 = vmatprep.subr.mxu0 0.0
        %243 = vmatpush1.msra.mxu0 0.0
        %244 = vmatprep.subr.mxu0 0.0
        %245 = vmatpush1.msra.mxu0 0.0
        %246 = vmatprep.subr.mxu0 0.0
        %247 = vmatpush1.msra.mxu0 0.0
        %248 = vmatprep.subr.mxu0 0.0
        %249 = vmatpush1.msra.mxu0 0.0
        %250 = vmatprep.subr.mxu0 0.0
        %251 = vmatpush1.msra.mxu0 0.0
        %252 = vmatprep.subr.mxu0 0.0
        %253 = vmatpush1.msra.mxu0 0.0
        %254 = vmatprep.subr.mxu0 0.0
        %255 = vmatpush1.msra.mxu0 0.0
        %256 = vmatprep.subr.mxu0 0.0
        %257 = vmatpush1.msra.mxu0 0.0
        %258 = vmatprep.subr.mxu0 0.0
        %259 = vmatpush1.msra.mxu0 0.0
        %260 = vmatprep.subr.mxu0 0.0
        %261 = vmatpush1.msra.mxu0 0.0
        %262 = vmatprep.subr.mxu0 0.0
        %263 = vmatpush1.msra.mxu0 0.0
        %264 = vmatprep.subr.mxu0 0.0
        %265 = vmatpush1.msra.mxu0 0.0
        %266 = vmatprep.subr.mxu0 0.0
        %267 = vmatpush1.msra.mxu0 0.0
        %268 = vmatprep.subr.mxu0 0.0
        %269 = vmatpush1.msra.mxu0 0.0
        %270 = vmatprep.subr.mxu0 0.0
        %271 = vmatpush1.msra.mxu0 0.0
        %272 = vmatprep.subr.mxu0 0.0
        %273 = vmatpush1.msra.mxu0 0.0
        %274 = vmatprep.subr.mxu0 0.0
        %275 = vmatpush1.msra.mxu0 0.0
        %276 = vmatprep.subr.mxu0 0.0
        %277 = vmatpush1.msra.mxu0 0.0
        %278 = vmatprep.subr.mxu0 0.0
        %279 = vmatpush1.msra.mxu0 0.0
        %280 = vmatprep.subr.mxu0 0.0
        %281 = vmatpush1.msra.mxu0 0.0
        %282 = vmatprep.subr.mxu0 0.0
        %283 = vmatpush1.msra.mxu0 0.0
        %284 = vmatprep.subr.mxu0 0.0
        %285 = vmatpush1.msra.mxu0 0.0
        %286 = vmatprep.subr.mxu0 0.0
        %287 = vmatpush1.msra.mxu0 0.0
        %288 = vmatprep.subr.mxu0 0.0
        %289 = vmatpush1.msra.mxu0 0.0
        %290 = vmatprep.subr.mxu0 0.0
        %291 = vmatpush1.msra.mxu0 0.0
        %292 = vmatprep.subr.mxu0 0.0
        %293 = vmatpush1.msra.mxu0 0.0
        %294 = vmatprep.subr.mxu0 0.0
        %295 = vmatpush1.msra.mxu0 0.0
        %296 = vmatprep.subr.mxu0 0.0
        %297 = vmatpush1.msra.mxu0 0.0
        %298 = vmatprep.mubr.f32.mxu0 0.0
        %299 = vmatmul.mubr.f32.gmra.mrb[0].mxu0 %v229
        %v300 = vpop.f32.mrb[0].mxu0
        %v301 = vadd.f32 0.0, %v300
        %v302 = vpop.f32.mrb[0].mxu0
        %303 = vmatprep.mubr.f32.mxu0 0.0
        %304 = vmatmul.mubr.f32.gmra.mrb[0].mxu0 %v232
        %v305 = vpop.f32.mrb[0].mxu0
        %v306 = vadd.f32 0.0, %v305
        %v307 = vpop.f32.mrb[0].mxu0
        %308 = vdwg.mxu0
        %309 = vst.msk [vmem:[%s220] sm:$0xff] %vm227, %v301
        %310 = vst.msk [vmem:[%s220 + $0x8] sm:$0xff] %vm227, %v306
        %s311 = scalar_lea.vmem %s186, 16 [#allocation2]
        %v312 = vld [vmem:[%s311] sm:$0xff]
        %v313 = vld [vmem:[%s311 + $0x8] sm:$0xff]
        %314 = vmatprep.subr.mxu0 0.0
        %315 = vmatpush1.msra.mxu0 %v312
        %316 = vmatprep.subr.mxu0 0.0
        %317 = vmatpush1.msra.mxu0 %v313
        %318 = vmatprep.subr.mxu0 0.0
        %319 = vmatpush1.msra.mxu0 0.0
        %320 = vmatprep.subr.mxu0 0.0
        %321 = vmatpush1.msra.mxu0 0.0
        %322 = vmatprep.subr.mxu0 0.0
        %323 = vmatpush1.msra.mxu0 0.0
        %324 = vmatprep.subr.mxu0 0.0
        %325 = vmatpush1.msra.mxu0 0.0
        %326 = vmatprep.subr.mxu0 0.0
        %327 = vmatpush1.msra.mxu0 0.0
        %328 = vmatprep.subr.mxu0 0.0
        %329 = vmatpush1.msra.mxu0 0.0
        %330 = vmatprep.subr.mxu0 0.0
        %331 = vmatpush1.msra.mxu0 0.0
        %332 = vmatprep.subr.mxu0 0.0
        %333 = vmatpush1.msra.mxu0 0.0
        %334 = vmatprep.subr.mxu0 0.0
        %335 = vmatpush1.msra.mxu0 0.0
        %336 = vmatprep.subr.mxu0 0.0
        %337 = vmatpush1.msra.mxu0 0.0
        %338 = vmatprep.subr.mxu0 0.0
        %339 = vmatpush1.msra.mxu0 0.0
        %340 = vmatprep.subr.mxu0 0.0
        %341 = vmatpush1.msra.mxu0 0.0
        %342 = vmatprep.subr.mxu0 0.0
        %343 = vmatpush1.msra.mxu0 0.0
        %344 = vmatprep.subr.mxu0 0.0
        %345 = vmatpush1.msra.mxu0 0.0
        %346 = vmatprep.subr.mxu0 0.0
        %347 = vmatpush1.msra.mxu0 0.0
        %348 = vmatprep.subr.mxu0 0.0
        %349 = vmatpush1.msra.mxu0 0.0
        %350 = vmatprep.subr.mxu0 0.0
        %351 = vmatpush1.msra.mxu0 0.0
        %352 = vmatprep.subr.mxu0 0.0
        %353 = vmatpush1.msra.mxu0 0.0
        %354 = vmatprep.subr.mxu0 0.0
        %355 = vmatpush1.msra.mxu0 0.0
        %356 = vmatprep.subr.mxu0 0.0
        %357 = vmatpush1.msra.mxu0 0.0
        %358 = vmatprep.subr.mxu0 0.0
        %359 = vmatpush1.msra.mxu0 0.0
        %360 = vmatprep.subr.mxu0 0.0
        %361 = vmatpush1.msra.mxu0 0.0
        %362 = vmatprep.subr.mxu0 0.0
        %363 = vmatpush1.msra.mxu0 0.0
        %364 = vmatprep.subr.mxu0 0.0
        %365 = vmatpush1.msra.mxu0 0.0
        %366 = vmatprep.subr.mxu0 0.0
        %367 = vmatpush1.msra.mxu0 0.0
        %368 = vmatprep.subr.mxu0 0.0
        %369 = vmatpush1.msra.mxu0 0.0
        %370 = vmatprep.subr.mxu0 0.0
        %371 = vmatpush1.msra.mxu0 0.0
        %372 = vmatprep.subr.mxu0 0.0
        %373 = vmatpush1.msra.mxu0 0.0
        %374 = vmatprep.subr.mxu0 0.0
        %375 = vmatpush1.msra.mxu0 0.0
        %376 = vmatprep.subr.mxu0 0.0
        %377 = vmatpush1.msra.mxu0 0.0
        %378 = vmatprep.mubr.f32.mxu0 0.0
        %379 = vmatmul.mubr.f32.gmra.mrb[0].mxu0 %v229
        %v380 = vpop.f32.mrb[0].mxu0
        %v381 = vadd.f32 0.0, %v380
        %v382 = vpop.f32.mrb[0].mxu0
        %383 = vmatprep.mubr.f32.mxu0 0.0
        %384 = vmatmul.mubr.f32.gmra.mrb[0].mxu0 %v232
        %v385 = vpop.f32.mrb[0].mxu0
        %v386 = vadd.f32 0.0, %v385
        %v387 = vpop.f32.mrb[0].mxu0
        %388 = vdwg.mxu0
        %s389 = scalar_lea.vmem %s220, 16 [#allocation7]
        %390 = vst.msk [vmem:[%s389] sm:$0xff] %vm227, %v381
        %391 = vst.msk [vmem:[%s389 + $0x8] sm:$0xff] %vm227, %v386
        %s392 = scalar_lea.vmem %s186, 32 [#allocation2]
        %v393 = vld [vmem:[%s392] sm:$0xff]
        %v394 = vld [vmem:[%s392 + $0x8] sm:$0xff]
        %395 = vmatprep.subr.mxu0 0.0
        %396 = vmatpush1.msra.mxu0 %v393
        %397 = vmatprep.subr.mxu0 0.0
        %398 = vmatpush1.msra.mxu0 %v394
        %399 = vmatprep.subr.mxu0 0.0
        %400 = vmatpush1.msra.mxu0 0.0
        %401 = vmatprep.subr.mxu0 0.0
        %402 = vmatpush1.msra.mxu0 0.0
        %403 = vmatprep.subr.mxu0 0.0
        %404 = vmatpush1.msra.mxu0 0.0
        %405 = vmatprep.subr.mxu0 0.0
        %406 = vmatpush1.msra.mxu0 0.0
        %407 = vmatprep.subr.mxu0 0.0
        %408 = vmatpush1.msra.mxu0 0.0
        %409 = vmatprep.subr.mxu0 0.0
        %410 = vmatpush1.msra.mxu0 0.0
        %411 = vmatprep.subr.mxu0 0.0
        %412 = vmatpush1.msra.mxu0 0.0
        %413 = vmatprep.subr.mxu0 0.0
        %414 = vmatpush1.msra.mxu0 0.0
        %415 = vmatprep.subr.mxu0 0.0
        %416 = vmatpush1.msra.mxu0 0.0
        %417 = vmatprep.subr.mxu0 0.0
        %418 = vmatpush1.msra.mxu0 0.0
        %419 = vmatprep.subr.mxu0 0.0
        %420 = vmatpush1.msra.mxu0 0.0
        %421 = vmatprep.subr.mxu0 0.0
        %422 = vmatpush1.msra.mxu0 0.0
        %423 = vmatprep.subr.mxu0 0.0
        %424 = vmatpush1.msra.mxu0 0.0
        %425 = vmatprep.subr.mxu0 0.0
        %426 = vmatpush1.msra.mxu0 0.0
        %427 = vmatprep.subr.mxu0 0.0
        %428 = vmatpush1.msra.mxu0 0.0
        %429 = vmatprep.subr.mxu0 0.0
        %430 = vmatpush1.msra.mxu0 0.0
        %431 = vmatprep.subr.mxu0 0.0
        %432 = vmatpush1.msra.mxu0 0.0
        %433 = vmatprep.subr.mxu0 0.0
        %434 = vmatpush1.msra.mxu0 0.0
        %435 = vmatprep.subr.mxu0 0.0
        %436 = vmatpush1.msra.mxu0 0.0
        %437 = vmatprep.subr.mxu0 0.0
        %438 = vmatpush1.msra.mxu0 0.0
        %439 = vmatprep.subr.mxu0 0.0
        %440 = vmatpush1.msra.mxu0 0.0
        %441 = vmatprep.subr.mxu0 0.0
        %442 = vmatpush1.msra.mxu0 0.0
        %443 = vmatprep.subr.mxu0 0.0
        %444 = vmatpush1.msra.mxu0 0.0
        %445 = vmatprep.subr.mxu0 0.0
        %446 = vmatpush1.msra.mxu0 0.0
        %447 = vmatprep.subr.mxu0 0.0
        %448 = vmatpush1.msra.mxu0 0.0
        %449 = vmatprep.subr.mxu0 0.0
        %450 = vmatpush1.msra.mxu0 0.0
        %451 = vmatprep.subr.mxu0 0.0
        %452 = vmatpush1.msra.mxu0 0.0
        %453 = vmatprep.subr.mxu0 0.0
        %454 = vmatpush1.msra.mxu0 0.0
        %455 = vmatprep.subr.mxu0 0.0
        %456 = vmatpush1.msra.mxu0 0.0
        %457 = vmatprep.subr.mxu0 0.0
        %458 = vmatpush1.msra.mxu0 0.0
        %459 = vmatprep.mubr.f32.mxu0 0.0
        %460 = vmatmul.mubr.f32.gmra.mrb[0].mxu0 %v229
        %v461 = vpop.f32.mrb[0].mxu0
        %v462 = vadd.f32 0.0, %v461
        %v463 = vpop.f32.mrb[0].mxu0
        %464 = vmatprep.mubr.f32.mxu0 0.0
        %465 = vmatmul.mubr.f32.gmra.mrb[0].mxu0 %v232
        %v466 = vpop.f32.mrb[0].mxu0
        %v467 = vadd.f32 0.0, %v466
        %v468 = vpop.f32.mrb[0].mxu0
        %469 = vdwg.mxu0
        %s470 = scalar_lea.vmem %s220, 32 [#allocation7]
        %471 = vst.msk [vmem:[%s470] sm:$0xff] %vm227, %v462
        %472 = vst.msk [vmem:[%s470 + $0x8] sm:$0xff] %vm227, %v467
        %s473 = scalar_lea.vmem %s186, 48 [#allocation2]
        %v474 = vld [vmem:[%s473] sm:$0xff]
        %v475 = vld [vmem:[%s473 + $0x8] sm:$0xff]
        %476 = vmatprep.subr.mxu0 0.0
        %477 = vmatpush1.msra.mxu0 %v474
        %478 = vmatprep.subr.mxu0 0.0
        %479 = vmatpush1.msra.mxu0 %v475
        %480 = vmatprep.subr.mxu0 0.0
        %481 = vmatpush1.msra.mxu0 0.0
        %482 = vmatprep.subr.mxu0 0.0
        %483 = vmatpush1.msra.mxu0 0.0
        %484 = vmatprep.subr.mxu0 0.0
        %485 = vmatpush1.msra.mxu0 0.0
        %486 = vmatprep.subr.mxu0 0.0
        %487 = vmatpush1.msra.mxu0 0.0
        %488 = vmatprep.subr.mxu0 0.0
        %489 = vmatpush1.msra.mxu0 0.0
        %490 = vmatprep.subr.mxu0 0.0
        %491 = vmatpush1.msra.mxu0 0.0
        %492 = vmatprep.subr.mxu0 0.0
        %493 = vmatpush1.msra.mxu0 0.0
        %494 = vmatprep.subr.mxu0 0.0
        %495 = vmatpush1.msra.mxu0 0.0
        %496 = vmatprep.subr.mxu0 0.0
        %497 = vmatpush1.msra.mxu0 0.0
        %498 = vmatprep.subr.mxu0 0.0
        %499 = vmatpush1.msra.mxu0 0.0
        %500 = vmatprep.subr.mxu0 0.0
        %501 = vmatpush1.msra.mxu0 0.0
        %502 = vmatprep.subr.mxu0 0.0
        %503 = vmatpush1.msra.mxu0 0.0
        %504 = vmatprep.subr.mxu0 0.0
        %505 = vmatpush1.msra.mxu0 0.0
        %506 = vmatprep.subr.mxu0 0.0
        %507 = vmatpush1.msra.mxu0 0.0
        %508 = vmatprep.subr.mxu0 0.0
        %509 = vmatpush1.msra.mxu0 0.0
        %510 = vmatprep.subr.mxu0 0.0
        %511 = vmatpush1.msra.mxu0 0.0
        %512 = vmatprep.subr.mxu0 0.0
        %513 = vmatpush1.msra.mxu0 0.0
        %514 = vmatprep.subr.mxu0 0.0
        %515 = vmatpush1.msra.mxu0 0.0
        %516 = vmatprep.subr.mxu0 0.0
        %517 = vmatpush1.msra.mxu0 0.0
        %518 = vmatprep.subr.mxu0 0.0
        %519 = vmatpush1.msra.mxu0 0.0
        %520 = vmatprep.subr.mxu0 0.0
        %521 = vmatpush1.msra.mxu0 0.0
        %522 = vmatprep.subr.mxu0 0.0
        %523 = vmatpush1.msra.mxu0 0.0
        %524 = vmatprep.subr.mxu0 0.0
        %525 = vmatpush1.msra.mxu0 0.0
        %526 = vmatprep.subr.mxu0 0.0
        %527 = vmatpush1.msra.mxu0 0.0
        %528 = vmatprep.subr.mxu0 0.0
        %529 = vmatpush1.msra.mxu0 0.0
        %530 = vmatprep.subr.mxu0 0.0
        %531 = vmatpush1.msra.mxu0 0.0
        %532 = vmatprep.subr.mxu0 0.0
        %533 = vmatpush1.msra.mxu0 0.0
        %534 = vmatprep.subr.mxu0 0.0
        %535 = vmatpush1.msra.mxu0 0.0
        %536 = vmatprep.subr.mxu0 0.0
        %537 = vmatpush1.msra.mxu0 0.0
        %538 = vmatprep.subr.mxu0 0.0
        %539 = vmatpush1.msra.mxu0 0.0
        %540 = vmatprep.mubr.f32.mxu0 0.0
        %541 = vmatmul.mubr.f32.gmra.mrb[0].mxu0 %v229
        %v542 = vpop.f32.mrb[0].mxu0
        %v543 = vadd.f32 0.0, %v542
        %v544 = vpop.f32.mrb[0].mxu0
        %545 = vmatprep.mubr.f32.mxu0 0.0
        %546 = vmatmul.mubr.f32.gmra.mrb[0].mxu0 %v232
        %v547 = vpop.f32.mrb[0].mxu0
        %v548 = vadd.f32 0.0, %v547
        %v549 = vpop.f32.mrb[0].mxu0
        %550 = vdwg.mxu0
        %s551 = scalar_lea.vmem %s220, 48 [#allocation7]
        %552 = vst.msk [vmem:[%s551] sm:$0xff] %vm227, %v543
        %553 = vst.msk [vmem:[%s551 + $0x8] sm:$0xff] %vm227, %v548
        %s554 = sand.u32 %s98, 1
        %s555 = scalar_lea.sflag [#allocation4], %s554
        %s556 = sand.u32 %s98, 1
        %s557 = smul.addr %s556, 64
        %s558 = scalar_lea.vmem [#allocation7], %s557
        // Predicated region
        $region37: #{tpu_custom_call.1} parent=27 // pred_check
          %p559 = pneg %p108
        $region38: #{tpu_custom_call.1} parent=27 // pred_check_branch
          %561 = sbr.rel (%p559) target = $region40
        $region39: #{tpu_custom_call.1} parent=27 // pred_region
          %s562 = smul.u32 4, %s27
          %s564 = ssub.s32 1024, 1024
          %565 = vsyncadd %s555, %s564
          %s566 = smul.addr %s562, 2
          %s567 = smul.addr %s26, 8
          %s568 = sadd.s32 %s566, %s567
          %s569 = smul.addr %s568, 128
          %s570 = scalar_lea.hbm %s2, %s569
          %s571 = sshll.u32 %s558, 4
          %s572 = int_to_ptr.vmem [resolvable:$true] %s571
          %577 = dma.vmem_to_hbm [thread:$0]  %s572, 1024, %s570, %s555, 128, 128, 8
        $region40: #{tpu_custom_call.1} parent=27 // pred_fallthru
          _
      $region28: #{tpu_custom_call.1} parent=5 // pred_fallthru
        _
      %p578 = scmp.le.s32.totalorder 2, %s17
      // Predicated region
      $region41: #{tpu_custom_call.1} parent=5 // pred_check
        %p579 = pneg %p578
      $region42: #{tpu_custom_call.1} parent=5 // pred_check_branch
        %581 = sbr.rel (%p579) target = $region44
      $region43: #{tpu_custom_call.1} parent=5 // pred_region
        %s582 = ssub.s32 %s17, 2
        // Predicated region
        $region45: #{tpu_custom_call.1} parent=43 // pred_check
          %p583 = pneg %p114
        $region46: #{tpu_custom_call.1} parent=43 // pred_check_branch
          %585 = sbr.rel (%p583) target = $region48
        $region47: #{tpu_custom_call.1} parent=43 // pred_region
          %s586 = sand.u32 %s99, 1
          %s587 = scalar_lea.sflag [#allocation4], %s586
          %s588 = sand.u32 %s99, 1
          %s589 = smul.addr %s588, 64
          %s590 = scalar_lea.vmem [#allocation7], %s589
          %591 = dma.done %s587, 1024
        $region48: #{tpu_custom_call.1} parent=43 // pred_fallthru
          _
      $region44: #{tpu_custom_call.1} parent=5 // pred_fallthru
        _
    $region6: #{tpu_custom_call.1} parent=1 // loop_footer
      %s21 = sadd.s32 1, %s17
    $region7: #{tpu_custom_call.1} parent=1 // loop_footer_branch
      %16 = sbr.rel target = $region3
    $region8: #{tpu_custom_call.1} parent=1 // loop_exit
      _
    %592 = vsyncpa [#allocation3], 1
    %s593 = scalar_lea.sflag [#allocation3], 1
    %594 = vsyncpa %s593, 1
    %595 = vsyncpa [#allocation6], 1
    %s596 = scalar_lea.sflag [#allocation6], 1
    %597 = vsyncpa %s596, 1
    %598 = vsyncpa [#allocation4], 1
    %s599 = scalar_lea.sflag [#allocation4], 1
    %600 = vsyncpa %s599, 1

</llo_original>
